<compile_context>
chip_gen: v7x
topology: tpu7x:2x2x1
jax: 0.10.0
libtpu: 0.0.40
codegen_flags: <defaults>
</compile_context>

<pallas_src>
import jax
import jax.numpy as jnp
from jax.experimental import pallas as pl
from jax.experimental.pallas import tpu as pltpu


def _round_up(x, m):
    return ((x + m - 1) // m) * m


def _patch_embed_kernel(x_ref, w_ref, b_ref, o_ref):
    # x_ref: (tm, K) bf16 patch rows; w_ref: (K, tn) bf16;
    # b_ref: (1, tn) f32; o_ref: (tm, tn) out dtype.
    acc = jnp.dot(x_ref[...], w_ref[...], preferred_element_type=jnp.float32)
    o_ref[...] = (acc + b_ref[...]).astype(o_ref.dtype)


def patch_embed(x, weight, bias, patch_size, *, tm=256, tn=None,
                compute_dtype=jnp.bfloat16):
    """x: (B, C, H, W) NCHW; weight: (E, C, P, P); bias: (E,) -> (B, N_patches, E)."""
    B, C, H, W = x.shape
    P = patch_size
    E = weight.shape[0]
    gh, gw = H // P, W // P
    num_patches = gh * gw
    out_dtype = x.dtype

    # Patchify: crop remainder (VALID conv), then lay each patch out as a row
    # of length C*P*P in (C, P, P) order, matching Conv2d weight (E, C, P, P)
    # flattened over its last three dims.
    # TODO(synk): fuse this transpose into the kernel (BlockSpec row-strips
    # over NCHW) to remove the intermediate HBM round-trip entirely.
    x = x[:, :, :gh * P, :gw * P]
    patches = x.reshape(B, C, gh, P, gw, P).transpose(0, 2, 4, 1, 3, 5)
    patches = patches.reshape(B * num_patches, C * P * P)
    w_flat = weight.reshape(E, C * P * P).T                      # (K, E)

    M, K = patches.shape
    N = E

    # K kept (nearly) unpadded: block K == full dim satisfies the (8,128)
    # rule without inflating HBM traffic or MXU contraction length. Pad only
    # to a multiple of 16 so bf16 sublane packing stays regular.
    K_pad = _round_up(K, 16)
    N_pad = _round_up(N, 128)
    tm = min(tm, _round_up(M, 8))                                # tiny inputs
    M_pad = _round_up(M, tm)
    if tn is None:
        if N_pad <= 1024:
            tn = N_pad                                           # single N tile
        else:
            tn = next(t for t in (1024, 512, 256, 128) if N_pad % t == 0)
    assert tn % 128 == 0 and N_pad % tn == 0

    if M_pad != M or K_pad != K:
        patches = jnp.pad(patches, ((0, M_pad - M), (0, K_pad - K)))
    if K_pad != K or N_pad != N:
        w_flat = jnp.pad(w_flat, ((0, K_pad - K), (0, N_pad - N)))
    b_row = bias.astype(jnp.float32).reshape(1, N)
    if N_pad != N:
        b_row = jnp.pad(b_row, ((0, 0), (0, N_pad - N)))

    # bf16 into the MXU; accumulation stays f32 inside the kernel.
    patches = patches.astype(compute_dtype)
    w_flat = w_flat.astype(compute_dtype)

    in_bytes = jnp.dtype(compute_dtype).itemsize
    out_bytes = jnp.dtype(out_dtype).itemsize

    # Double-buffered tile footprint + headroom (fits v7x's 64 MiB VMEM).
    vmem_need = (2 * tm * K_pad * in_bytes
                 + 2 * K_pad * tn * in_bytes
                 + 2 * 8 * 128 * 4                               # bias tile
                 + 2 * tm * tn * out_bytes)
    vmem_limit = int(min(max(2 * vmem_need, 16 * 1024 * 1024),
                         40 * 1024 * 1024))

    cost = pl.CostEstimate(
        flops=2 * M * K * N,
        transcendentals=0,
        bytes_accessed=(M * K + K * N) * in_bytes + N * 4 + M * N * out_bytes,
    )

    grid_n = N_pad // tn
    grid_m = M_pad // tm

    out = pl.pallas_call(
        _patch_embed_kernel,
        out_shape=jax.ShapeDtypeStruct((M_pad, N_pad), out_dtype),
        grid_spec=pltpu.PrefetchScalarGridSpec(
            num_scalar_prefetch=0,
            # N tiles outer / M tiles inner: the big weight slab stays
            # resident across the inner loop; only the small patch tile moves.
            grid=(grid_n, grid_m),
            in_specs=[
                pl.BlockSpec((tm, K_pad), lambda j, i: (i, 0)),   # patch rows
                pl.BlockSpec((K_pad, tn), lambda j, i: (0, j)),   # weight slab
                pl.BlockSpec((1, tn), lambda j, i: (0, j)),       # bias (f32)
            ],
            out_specs=pl.BlockSpec((tm, tn), lambda j, i: (i, j)),
        ),
        compiler_params=pltpu.CompilerParams(
            dimension_semantics=("parallel", "parallel"),
            vmem_limit_bytes=vmem_limit,
        ),
        cost_estimate=cost,
    )(patches, w_flat, b_row)

    out = out[:M, :N]
    return out.reshape(B, num_patches, E)


if __name__ == "__main__":
    # Small shapes consistent with the module's forward.
    B, C, IMG, P, E = 2, 3, 16, 4, 32
    key = jax.random.PRNGKey(0)
    kx, kw, kb = jax.random.split(key, 3)

    x = jax.random.normal(kx, (B, C, IMG, IMG), dtype=jnp.float32)
    weight = jax.random.normal(kw, (E, C, P, P), dtype=jnp.float32) * 0.02
    bias = jax.random.normal(kb, (E,), dtype=jnp.float32) * 0.02

    out = patch_embed(x, weight, bias, P)
    out = jax.block_until_ready(out)

    # Reference: strided conv in plain JAX, then flatten(2).transpose(1, 2).
    ref = jax.lax.conv_general_dilated(
        x, weight, window_strides=(P, P), padding="VALID",
        dimension_numbers=("NCHW", "OIHW", "NCHW"),
    ) + bias.reshape(1, E, 1, 1)
    ref = ref.reshape(B, E, -1).transpose(0, 2, 1)

    assert out.shape == (B, (IMG // P) ** 2, E)
    # bf16 operands / f32 accumulation -> loose-ish tolerance vs f32 conv ref.
    assert jnp.allclose(out, ref, atol=2e-2, rtol=2e-2), float(
        jnp.max(jnp.abs(out - ref)))
    print("KERNEL_OK")
</pallas_src>

<mosaic_0001>
module attributes {stable_mosaic.version = 11 : i64} {
  func.func @_patch_embed_kernel(%arg0: i32, %arg1: i32, %arg2: memref<32x48xbf16, #tpu.memory_space<vmem>>, %arg3: memref<48x128xbf16, #tpu.memory_space<vmem>>, %arg4: memref<1x128xf32, #tpu.memory_space<vmem>>, %arg5: memref<32x128xf32, #tpu.memory_space<vmem>>) attributes {dimension_semantics = [#tpu.dimension_semantics<parallel>, #tpu.dimension_semantics<parallel>], iteration_bounds = array<i64: 1, 1>, scalar_prefetch = 0 : i64, scratch_operands = 0 : i64, tpu.core_type = #tpu.core_type<tc>, window_params = [{transform_indices = @transform_0, window_bounds = array<i64: 32, 48>}, {transform_indices = @transform_1, window_bounds = array<i64: 48, 128>}, {transform_indices = @transform_2, window_bounds = array<i64: 1, 128>}, {transform_indices = @transform_3, window_bounds = array<i64: 32, 128>}]} {
    %c0 = arith.constant 0 : index
    %c0_0 = arith.constant 0 : index
    %0 = vector.load %arg2[%c0, %c0_0] : memref<32x48xbf16, #tpu.memory_space<vmem>>, vector<32x48xbf16>
    %c0_1 = arith.constant 0 : index
    %c0_2 = arith.constant 0 : index
    %1 = vector.load %arg3[%c0_1, %c0_2] : memref<48x128xbf16, #tpu.memory_space<vmem>>, vector<48x128xbf16>
    %cst = arith.constant dense<0.000000e+00> : vector<32x128xf32>
    %2 = tpu.matmul %0, %1, %cst {dimension_numbers = #tpu.dot_dimension_numbers<[1], [0], [0], [1], [0, 0, 1, 1], [], []>} : vector<32x48xbf16>, vector<48x128xbf16>, vector<32x128xf32> -> vector<32x128xf32>
    %c0_3 = arith.constant 0 : index
    %c0_4 = arith.constant 0 : index
    %3 = vector.load %arg4[%c0_3, %c0_4] : memref<1x128xf32, #tpu.memory_space<vmem>>, vector<1x128xf32>
    %4 = vector.broadcast %3 : vector<1x128xf32> to vector<32x128xf32>
    %5 = arith.addf %2, %4 : vector<32x128xf32>
    %c0_5 = arith.constant 0 : index
    %c0_6 = arith.constant 0 : index
    %6 = vector.load %arg5[%c0_5, %c0_6] : memref<32x128xf32, #tpu.memory_space<vmem>>, vector<32x128xf32>
    tpu.vector_store %arg5[%c0_5, %c0_6], %5 {strides = array<i32>} : memref<32x128xf32, #tpu.memory_space<vmem>>, vector<32x128xf32>,
    return
  }
  func.func @transform_0(%arg0: i32, %arg1: i32) -> (i32, i32) {
    %c0_i32 = arith.constant 0 : i32
    %c0_i32_0 = arith.constant 0 : i32
    return %arg1, %c0_i32 : i32, i32
  }
  func.func @transform_1(%arg0: i32, %arg1: i32) -> (i32, i32) {
    %c0_i32 = arith.constant 0 : i32
    %c0_i32_0 = arith.constant 0 : i32
    return %c0_i32, %arg0 : i32, i32
  }
  func.func @transform_2(%arg0: i32, %arg1: i32) -> (i32, i32) {
    %c0_i32 = arith.constant 0 : i32
    %c0_i32_0 = arith.constant 0 : i32
    return %c0_i32, %arg0 : i32, i32
  }
  func.func @transform_3(%arg0: i32, %arg1: i32) -> (i32, i32) {
    %c0_i32 = arith.constant 0 : i32
    return %arg1, %arg0 : i32, i32
  }
}

</mosaic_0001>

<llo_original>
// kernel: tpu_custom_call.1
$region0: #{tpu_custom_call.1}
  #allocation0 [shape = 'u32[]', space=smem, size = 0x4, offset = 0x4, fixed_abs, tag = 'smem constant byte address 0x4 - core index']
  #allocation1 [shape = 'u32[144,128]{1,0:T(1,128)}', space=vmem, size = 0x12000, scoped, tag = 'internal scratch']
  %s0 = inlined_call_operand.hbm [shape: bf16[32,48], index: 0, kind: input, shape index: {}]
  %s1 = inlined_call_operand.hbm [shape: bf16[48,128], index: 1, kind: input, shape index: {}]
  %s2 = inlined_call_operand.vmem [shape: f32[1,128], index: 2, kind: input, shape index: {}]
  %s3 = inlined_call_operand.hbm [shape: f32[32,128], index: 3, kind: output, shape index: {}]
  %s4 = sld [smem:[#allocation0]]
  $region30: #{tpu_custom_call.1} parent=0
    _
  %s6 = ssub.s32 1, %s4
  %s7 = scalar_select 0, %s6, %s4
  $region1: #{tpu_custom_call.1} parent=0
    #allocation2 [shape = 'u8[8192]{0}', space=vmem, size = 0x2000, scoped, tag = 'input window, operand 0, single buffered']
    #allocation3 [shape = 's32[1]{0}', space=sflag, size = 0x4, scoped, tag = 'scoped memory for tpu_custom_call.1']
    #allocation4 [shape = 's32[1]{0}', space=sflag, size = 0x4, scoped, tag = 'scoped memory for tpu_custom_call.1']
    #allocation5 [shape = 'u8[12288]{0}', space=vmem, size = 0x3000, scoped, tag = 'input window, operand 1, single buffered']
    #allocation6 [shape = 's32[1]{0}', space=sflag, size = 0x4, scoped, tag = 'scoped memory for tpu_custom_call.1']
    #allocation7 [shape = 'u8[16384]{0}', space=vmem, size = 0x4000, scoped, tag = 'output window, operand 0, single buffered']
    %8 = vsyncpa [#allocation3], 0
    %9 = vsyncpa [#allocation6], 0
    %10 = vsyncpa [#allocation4], 0
    // Predicated region
    $region2: #{tpu_custom_call.1} parent=1 // pred_check
      _
    $region3: #{tpu_custom_call.1} parent=1 // pred_check_branch
      %12 = sbr.rel (0) target = $region5
    $region4: #{tpu_custom_call.1} parent=1 // pred_region
      %s14 = ssub.s32 256, 256
      %15 = vsyncadd [#allocation3], %s14
      %s16 = sshll.u32 [#allocation2], 4
      %s17 = int_to_ptr.vmem [resolvable:$true] %s16
      %22 = dma.hbm_to_vmem [thread:$0]  %s0, 256, %s17, [#allocation3], 64, 64, 4
    $region5: #{tpu_custom_call.1} parent=1 // pred_fallthru
      _
    // Predicated region
    $region6: #{tpu_custom_call.1} parent=1 // pred_check
      _
    $region7: #{tpu_custom_call.1} parent=1 // pred_check_branch
      %24 = sbr.rel (0) target = $region9
    $region8: #{tpu_custom_call.1} parent=1 // pred_region
      %s26 = ssub.s32 384, 384
      %27 = vsyncadd [#allocation6], %s26
      %s28 = sshll.u32 [#allocation5], 4
      %s29 = int_to_ptr.vmem [resolvable:$true] %s28
      %34 = dma.hbm_to_vmem [thread:$0]  %s1, 384, %s29, [#allocation6], 64, 64, 4
    $region9: #{tpu_custom_call.1} parent=1 // pred_fallthru
      _
    // Predicated region
    $region10: #{tpu_custom_call.1} parent=1 // pred_check
      _
    $region11: #{tpu_custom_call.1} parent=1 // pred_check_branch
      %36 = sbr.rel (0) target = $region13
    $region12: #{tpu_custom_call.1} parent=1 // pred_region
      _
    $region13: #{tpu_custom_call.1} parent=1 // pred_fallthru
      _
    // Predicated region
    $region14: #{tpu_custom_call.1} parent=1 // pred_check
      _
    $region15: #{tpu_custom_call.1} parent=1 // pred_check_branch
      %38 = sbr.rel (0) target = $region17
    $region16: #{tpu_custom_call.1} parent=1 // pred_region
      %39 = dma.done [#allocation3], 256
    $region17: #{tpu_custom_call.1} parent=1 // pred_fallthru
      _
    // Predicated region
    $region18: #{tpu_custom_call.1} parent=1 // pred_check
      _
    $region19: #{tpu_custom_call.1} parent=1 // pred_check_branch
      %41 = sbr.rel (0) target = $region21
    $region20: #{tpu_custom_call.1} parent=1 // pred_region
      %42 = dma.done [#allocation6], 384
    $region21: #{tpu_custom_call.1} parent=1 // pred_fallthru
      _
    %v44 = vld [vmem:[#allocation2] sm:$0xf]
    %v45 = vld [vmem:[#allocation2 + $0x4] sm:$0xf]
    %v46 = vld [vmem:[#allocation2 + $0x8] sm:$0xf]
    %v47 = vld [vmem:[#allocation2 + $0xc] sm:$0xf]
    %v48 = vld [vmem:[#allocation5] sm:$0xf]
    %v49 = vld [vmem:[#allocation5 + $0x4] sm:$0xf]
    %v50 = vld [vmem:[#allocation5 + $0x8] sm:$0xf]
    %v51 = vld [vmem:[#allocation5 + $0xc] sm:$0xf]
    %v52 = vld [vmem:[#allocation5 + $0x10] sm:$0xf]
    %v53 = vld [vmem:[#allocation5 + $0x14] sm:$0xf]
    %v54 = vld [vmem:[%s2] sm:$0x1]
    %v56 = vlaneseq
    %v57 = vshrl.u32 %v56, 7
    %v58 = vsub.s32 0, %v57
    %v59 = vrot.slane %v54, %v58
    %v65 = vunpack.c.l.b16 %v44
    %v66 = vunpack.c.l.b16 %v45
    %v67 = vunpack.c.l.b16 %v46
    %v68 = vunpack.c.l.b16 %v47
    %v69 = vpack.c.b16 %v66, %v65
    %v70 = vpack.c.b16 %v68, %v67
    %v77 = vunpack.c.l.b16 %v48
    %v78 = vunpack.c.l.b16 %v49
    %v79 = vunpack.c.l.b16 %v50
    %v80 = vunpack.c.l.b16 %v51
    %v81 = vunpack.c.l.b16 %v52
    %v82 = vunpack.c.l.b16 %v53
    %v83 = vpack.c.b16 %v78, %v77
    %v84 = vpack.c.b16 %v80, %v79
    %v85 = vpack.c.b16 %v82, %v81
    %vm89 = vcmask 392192
    %v91 = vsel %vm89, %v69, 0
    %v94 = vsel %vm89, %v70, 0
    %96 = vmatprep.subr.bf16.mxu0 0
    %97 = vmatpush1.bf16.msra.mxu0 %v83
    %98 = vmatprep.subr.bf16.mxu0 0
    %99 = vmatpush1.bf16.msra.mxu0 %v84
    %100 = vmatprep.subr.bf16.mxu0 0
    %101 = vmatpush1.bf16.msra.mxu0 %v85
    %102 = vmatprep.subr.bf16.mxu0 0
    %103 = vmatpush1.bf16.msra.mxu0 0
    %104 = vmatprep.subr.bf16.mxu0 0
    %105 = vmatpush1.bf16.msra.mxu0 0
    %106 = vmatprep.subr.bf16.mxu0 0
    %107 = vmatpush1.bf16.msra.mxu0 0
    %108 = vmatprep.subr.bf16.mxu0 0
    %109 = vmatpush1.bf16.msra.mxu0 0
    %110 = vmatprep.subr.bf16.mxu0 0
    %111 = vmatpush1.bf16.msra.mxu0 0
    %112 = vmatprep.subr.bf16.mxu0 0
    %113 = vmatpush1.bf16.msra.mxu0 0
    %114 = vmatprep.subr.bf16.mxu0 0
    %115 = vmatpush1.bf16.msra.mxu0 0
    %116 = vmatprep.subr.bf16.mxu0 0
    %117 = vmatpush1.bf16.msra.mxu0 0
    %118 = vmatprep.subr.bf16.mxu0 0
    %119 = vmatpush1.bf16.msra.mxu0 0
    %120 = vmatprep.subr.bf16.mxu0 0
    %121 = vmatpush1.bf16.msra.mxu0 0
    %122 = vmatprep.subr.bf16.mxu0 0
    %123 = vmatpush1.bf16.msra.mxu0 0
    %124 = vmatprep.subr.bf16.mxu0 0
    %125 = vmatpush1.bf16.msra.mxu0 0
    %126 = vmatprep.subr.bf16.mxu0 0
    %127 = vmatpush1.bf16.msra.mxu0 0
    %128 = vmatprep.mubr.bf16.mxu0 0
    %129 = vmatmul.mubr.bf16.gmra.mrb[0].mxu0 %v91
    %v130 = vpop.f32.mrb[0].mxu0
    %v131 = vadd.f32 %v59, %v130
    %v132 = vpop.f32.mrb[0].mxu0
    %v133 = vpop.f32.mrb[0].mxu0
    %v134 = vadd.f32 %v59, %v133
    %v135 = vpop.f32.mrb[0].mxu0
    %136 = vmatprep.mubr.bf16.mxu0 0
    %137 = vmatmul.mubr.bf16.gmra.mrb[0].mxu0 %v94
    %v138 = vpop.f32.mrb[0].mxu0
    %v139 = vadd.f32 %v59, %v138
    %v140 = vpop.f32.mrb[0].mxu0
    %v141 = vpop.f32.mrb[0].mxu0
    %v142 = vadd.f32 %v59, %v141
    %v143 = vpop.f32.mrb[0].mxu0
    %144 = vdwg.mxu0
    %145 = vst [vmem:[#allocation7] sm:$0xff] %v131
    %146 = vst [vmem:[#allocation7 + $0x8] sm:$0xff] %v134
    %147 = vst [vmem:[#allocation7 + $0x10] sm:$0xff] %v139
    %148 = vst [vmem:[#allocation7 + $0x18] sm:$0xff] %v142
    // Predicated region
    $region22: #{tpu_custom_call.1} parent=1 // pred_check
      _
    $region23: #{tpu_custom_call.1} parent=1 // pred_check_branch
      %150 = sbr.rel (0) target = $region25
    $region24: #{tpu_custom_call.1} parent=1 // pred_region
      %s152 = ssub.s32 512, 512
      %153 = vsyncadd [#allocation4], %s152
      %s154 = sshll.u32 [#allocation7], 4
      %s155 = int_to_ptr.vmem [resolvable:$true] %s154
      %160 = dma.vmem_to_hbm [thread:$0]  %s155, 512, %s3, [#allocation4], 128, 128, 8
    $region25: #{tpu_custom_call.1} parent=1 // pred_fallthru
      _
    // Predicated region
    $region26: #{tpu_custom_call.1} parent=1 // pred_check
      _
    $region27: #{tpu_custom_call.1} parent=1 // pred_check_branch
      %162 = sbr.rel (0) target = $region29
    $region28: #{tpu_custom_call.1} parent=1 // pred_region
      %163 = dma.done [#allocation4], 512
    $region29: #{tpu_custom_call.1} parent=1 // pred_fallthru
      _
    %164 = vsyncpa [#allocation3], 1
    %165 = vsyncpa [#allocation6], 1
    %166 = vsyncpa [#allocation4], 1

</llo_original>
